<compile_context>
chip_gen: v5e
topology: v5e:2x2
jax: 0.10.0
libtpu: 0.0.40
codegen_flags: <defaults>
</compile_context>

<pallas_src>
import jax
import jax.numpy as jnp
from jax.experimental import pallas as pl
from jax.experimental.pallas import tpu as pltpu


def _exchange_kernel(m1_ref, m2_ref, x0_ref, x1_ref, o1_ref, o2_ref):
    """Gated exchange between the two feature maps.

    m1_ref / m2_ref : VMEM (TR, 1) or (TR, TL); nonzero where the stream keeps
                      its own values.
    x0_ref / x1_ref : VMEM (TR, TL) input tiles.
    o1_ref / o2_ref : VMEM (TR, TL) output tiles.
    """
    keep1 = m1_ref[...] != 0          # broadcasts over lanes when (TR, 1)
    keep2 = m2_ref[...] != 0
    a = x0_ref[...]
    b = x1_ref[...]
    o1_ref[...] = jnp.where(keep1, a, b)
    o2_ref[...] = jnp.where(keep2, b, a)


def _chip_info():
    """(vmem_capacity_bytes, tensorcores_per_chip) with conservative fallbacks."""
    kind = ""
    try:
        kind = jax.devices()[0].device_kind.lower()
    except Exception:
        pass
    n_tc = 2 if "v7" in kind else 1
    vmem_bytes = None
    try:
        vmem_bytes = int(pltpu.get_tpu_info().vmem_capacity_bytes)
    except Exception:
        vmem_bytes = None
    if not vmem_bytes or vmem_bytes <= 0:
        # If we cannot identify the chip, assume the smallest per-TC VMEM.
        vmem_bytes = (128 << 20) if ("v5" in kind or "v6" in kind) else (64 << 20)
    return vmem_bytes, n_tc


def _pick_lane_tile(L, max_lane):
    """Largest lane tile <= max_lane, preferring one that divides L."""
    if L <= max_lane:
        return L
    best = (max_lane // 128) * 128
    for t in range(best, best // 2 - 1, -128):
        if L % t == 0:
            return t
    return best  # partial last tile (Pallas clamps it)


def _pick_row_tile(R, tl, bytes_per, sub_min, block_budget):
    """Largest row tile that keeps one stream block under block_budget bytes."""
    max_rows = max(sub_min, block_budget // max(1, tl * bytes_per))
    if R <= max_rows:
        return R
    return max(sub_min, (max_rows // sub_min) * sub_min)


def exchange(x0, x1, bn1_weight, bn2_weight, bn_threshold, *,
             max_lane_tile=8192, donate=False, use_fast_path=True):
    """x0, x1: (N, C, H, W); bn*_weight: (C,); returns [x1_out, x2_out] (NCHW)."""
    N, C, H, W = x0.shape
    dtype = x0.dtype
    bytes_per = jnp.dtype(dtype).itemsize
    total = N * C * H * W

    w1 = jnp.asarray(bn1_weight, jnp.float32)
    w2 = jnp.asarray(bn2_weight, jnp.float32)
    thr = jnp.float32(bn_threshold)
    keep1_c = jnp.abs(w1) >= thr          # (C,) bool
    keep2_c = jnp.abs(w2) >= thr

    # ---- tiny-problem fast path: launch/pipeline overhead would dominate ----
    if use_fast_path and 4 * total * bytes_per < (1 << 20):
        m1 = keep1_c[None, :, None, None]
        m2 = keep2_c[None, :, None, None]
        return [jnp.where(m1, x0, x1), jnp.where(m2, x1, x0)]

    R = N * C            # sublane axis (batch folded into channels)
    L = H * W            # lane axis

    dense_mask = False
    if L >= 128:
        # Free reshapes (NCHW is contiguous over H*W and over N*C*H*W).
        x0_r = x0.reshape(R, L)
        x1_r = x1.reshape(R, L)
        # Per-row masks, tiny (R floats each), broadcast over lanes in-kernel.
        m1 = jnp.tile(keep1_c.astype(jnp.float32).reshape(C, 1), (N, 1))
        m2 = jnp.tile(keep2_c.astype(jnp.float32).reshape(C, 1), (N, 1))
    elif total % 128 == 0:
        # Lane-sparse spatial (H*W < 128): repack to a lane-dense layout and
        # use a per-element int8 mask so every store is a full-lane vst.
        cap = min(max_lane_tile, total)
        LD = 128
        for cand in range(cap - cap % 128, 127, -128):
            if total % cand == 0:
                LD = cand
                break
        R = total // LD
        L = LD
        x0_r = x0.reshape(R, L)
        x1_r = x1.reshape(R, L)
        m1 = jnp.broadcast_to(keep1_c[None, :, None, None],
                              (N, C, H, W)).reshape(R, L).astype(jnp.int8)
        m2 = jnp.broadcast_to(keep2_c[None, :, None, None],
                              (N, C, H, W)).reshape(R, L).astype(jnp.int8)
        dense_mask = True
    else:
        # Degenerate layout (lane-sparse and not 128-divisible): let XLA fuse it.
        m1 = keep1_c[None, :, None, None]
        m2 = keep2_c[None, :, None, None]
        return [jnp.where(m1, x0, x1), jnp.where(m2, x1, x0)]

    # ---- generation-aware block budget / VMEM cap ----------------------------
    vmem_bytes, n_tc = _chip_info()
    if n_tc >= 2:
        # v7x: 64 MiB VMEM per TC -> bigger blocks than before but stay well
        # under the cap (4 streams x double buffer + masks + headroom).
        block_budget = 5 << 20
        vmem_cap = min(52 << 20, max(32 << 20, vmem_bytes - (8 << 20)))
    else:
        # v5e / v6e: 128 MiB physical VMEM; explicit limit overrides the
        # 16/32 MiB scoped defaults.
        block_budget = 7 << 20
        vmem_cap = min(96 << 20, max(32 << 20, vmem_bytes - (16 << 20)))

    sub_min = {4: 8, 2: 16, 1: 32}.get(bytes_per, 8)
    if dense_mask:
        sub_min = max(sub_min, 32)   # int8 mask rows pack 32 per sublane tile

    tl = _pick_lane_tile(L, max_lane_tile)
    tr = _pick_row_tile(R, tl, bytes_per, sub_min, block_budget)

    gr, gl = pl.cdiv(R, tr), pl.cdiv(L, tl)
    if n_tc >= 2 and gr * gl < 2:
        # Feed the second TensorCore.  Prefer splitting rows (keeps tiles
        # lane-dense and DMAs fully contiguous); fall back to halving lanes.
        if tr == R and R % (2 * sub_min) == 0:
            tr = R // 2
        elif tl == L and L % 256 == 0:
            tl = L // 2
        gr, gl = pl.cdiv(R, tr), pl.cdiv(L, tl)

    # ---- VMEM accounting (includes lane-padded mask blocks) ------------------
    block_bytes = tr * tl * bytes_per
    if dense_mask:
        mask_block_bytes = tr * tl                 # int8, full-tile masks
    else:
        mask_block_bytes = tr * 128 * 4            # (tr,1) f32 lane-pads to (tr,128)
    vmem_need = 2 * (4 * block_bytes + 2 * mask_block_bytes)   # double-buffered
    vmem_limit = int(min(vmem_cap, max(16 << 20, vmem_need + (4 << 20))))

    if dense_mask:
        mask_spec = pl.BlockSpec((tr, tl), lambda r, j: (r, j))
    else:
        mask_spec = pl.BlockSpec((tr, 1), lambda r, j: (r, 0))
    tile_spec = pl.BlockSpec((tr, tl), lambda r, j: (r, j))

    extra = {}
    if donate:
        # Caller donates x0/x1 (e.g. jax.jit donate_argnums): reuse their HBM
        # buffers for the outputs (bytes moved unchanged, peak footprint halved).
        extra["input_output_aliases"] = {2: 0, 3: 1}

    o1_r, o2_r = pl.pallas_call(
        _exchange_kernel,
        grid=(gr, gl),
        in_specs=[mask_spec, mask_spec, tile_spec, tile_spec],
        out_specs=(tile_spec, tile_spec),
        out_shape=(jax.ShapeDtypeStruct((R, L), dtype),
                   jax.ShapeDtypeStruct((R, L), dtype)),
        compiler_params=pltpu.CompilerParams(
            dimension_semantics=("parallel", "parallel"),
            vmem_limit_bytes=vmem_limit,
        ),
        **extra,
    )(m1, m2, x0_r, x1_r)

    return [o1_r.reshape(N, C, H, W), o2_r.reshape(N, C, H, W)]


def _reference(x0, x1, w1, w2, thr):
    m1 = (jnp.abs(w1) >= thr)[None, :, None, None]
    m2 = (jnp.abs(w2) >= thr)[None, :, None, None]
    return [jnp.where(m1, x0, x1), jnp.where(m2, x1, x0)]


def _check(key, shape, thr, **kw):
    k0, k1, k2, k3 = jax.random.split(key, 4)
    N, C, H, W = shape
    x0 = jax.random.normal(k0, (N, C, H, W), jnp.float32)
    x1 = jax.random.normal(k1, (N, C, H, W), jnp.float32)
    bn1_weight = jax.random.normal(k2, (C,), jnp.float32)
    bn2_weight = jax.random.normal(k3, (C,), jnp.float32)

    out1, out2 = exchange(x0, x1, bn1_weight, bn2_weight, thr, **kw)
    jax.block_until_ready(out1)
    jax.block_until_ready(out2)

    ref1, ref2 = _reference(x0, x1, bn1_weight, bn2_weight, thr)
    assert jnp.allclose(out1, ref1), f"x1 mismatch for shape {shape} ({kw})"
    assert jnp.allclose(out2, ref2), f"x2 mismatch for shape {shape} ({kw})"


if __name__ == "__main__":
    key = jax.random.PRNGKey(0)
    k_a, k_b, k_c, k_d = jax.random.split(key, 4)

    # Primary shape from the module spec (tiny -> XLA fast path).
    _check(k_a, (2, 4, 16, 16), 0.5)
    # Same shape forced through the Pallas kernel.
    _check(k_b, (2, 4, 16, 16), 0.5, use_fast_path=False)
    # Non-128-multiple lane extent (full-row block, exercises layout handling).
    _check(k_c, (2, 4, 16, 150), 0.5, use_fast_path=False)
    # Spatial < 128: lane-dense repack path with per-element int8 mask.
    _check(k_d, (2, 8, 8, 8), 0.5, use_fast_path=False)

    print("KERNEL_OK")
</pallas_src>

<mosaic_0001>
module attributes {stable_mosaic.version = 11 : i64} {
  func.func @_exchange_kernel(%arg0: i32, %arg1: i32, %arg2: memref<8x1xf32, #tpu.memory_space<vmem>>, %arg3: memref<8x1xf32, #tpu.memory_space<vmem>>, %arg4: memref<8x256xf32, #tpu.memory_space<vmem>>, %arg5: memref<8x256xf32, #tpu.memory_space<vmem>>, %arg6: memref<8x256xf32, #tpu.memory_space<vmem>>, %arg7: memref<8x256xf32, #tpu.memory_space<vmem>>) attributes {dimension_semantics = [#tpu.dimension_semantics<parallel>, #tpu.dimension_semantics<parallel>], iteration_bounds = array<i64: 1, 1>, scalar_prefetch = 0 : i64, scratch_operands = 0 : i64, tpu.core_type = #tpu.core_type<tc>, window_params = [{transform_indices = @transform_0, window_bounds = array<i64: 8, 1>}, {transform_indices = @transform_1, window_bounds = array<i64: 8, 1>}, {transform_indices = @transform_2, window_bounds = array<i64: 8, 256>}, {transform_indices = @transform_3, window_bounds = array<i64: 8, 256>}, {transform_indices = @transform_4, window_bounds = array<i64: 8, 256>}, {transform_indices = @transform_5, window_bounds = array<i64: 8, 256>}]} {
    %c0 = arith.constant 0 : index
    %c0_0 = arith.constant 0 : index
    %0 = vector.load %arg2[%c0, %c0_0] : memref<8x1xf32, #tpu.memory_space<vmem>>, vector<8x1xf32>
    %cst = arith.constant 0.000000e+00 : f32
    %1 = vector.broadcast %cst : f32 to vector<8x1xf32>
    %2 = arith.cmpf one, %0, %1 : vector<8x1xf32>
    %c0_1 = arith.constant 0 : index
    %c0_2 = arith.constant 0 : index
    %3 = vector.load %arg3[%c0_1, %c0_2] : memref<8x1xf32, #tpu.memory_space<vmem>>, vector<8x1xf32>
    %cst_3 = arith.constant 0.000000e+00 : f32
    %4 = vector.broadcast %cst_3 : f32 to vector<8x1xf32>
    %5 = arith.cmpf one, %3, %4 : vector<8x1xf32>
    %c0_4 = arith.constant 0 : index
    %c0_5 = arith.constant 0 : index
    %6 = vector.load %arg4[%c0_4, %c0_5] : memref<8x256xf32, #tpu.memory_space<vmem>>, vector<8x256xf32>
    %c0_6 = arith.constant 0 : index
    %c0_7 = arith.constant 0 : index
    %7 = vector.load %arg5[%c0_6, %c0_7] : memref<8x256xf32, #tpu.memory_space<vmem>>, vector<8x256xf32>
    %8 = vector.shape_cast %2 : vector<8x1xi1> to vector<8x1xi1>
    %9 = vector.broadcast %8 : vector<8x1xi1> to vector<8x256xi1>
    %10 = arith.select %9, %6, %7 : vector<8x256xi1>, vector<8x256xf32>
    %c0_8 = arith.constant 0 : index
    %c0_9 = arith.constant 0 : index
    %11 = vector.load %arg6[%c0_8, %c0_9] : memref<8x256xf32, #tpu.memory_space<vmem>>, vector<8x256xf32>
    tpu.vector_store %arg6[%c0_8, %c0_9], %10 {strides = array<i32>} : memref<8x256xf32, #tpu.memory_space<vmem>>, vector<8x256xf32>,
    %12 = vector.shape_cast %5 : vector<8x1xi1> to vector<8x1xi1>
    %13 = vector.broadcast %12 : vector<8x1xi1> to vector<8x256xi1>
    %14 = arith.select %13, %7, %6 : vector<8x256xi1>, vector<8x256xf32>
    %c0_10 = arith.constant 0 : index
    %c0_11 = arith.constant 0 : index
    %15 = vector.load %arg7[%c0_10, %c0_11] : memref<8x256xf32, #tpu.memory_space<vmem>>, vector<8x256xf32>
    tpu.vector_store %arg7[%c0_10, %c0_11], %14 {strides = array<i32>} : memref<8x256xf32, #tpu.memory_space<vmem>>, vector<8x256xf32>,
    return
  }
  func.func @transform_0(%arg0: i32, %arg1: i32) -> (i32, i32) {
    %c0_i32 = arith.constant 0 : i32
    %c0_i32_0 = arith.constant 0 : i32
    return %arg0, %c0_i32 : i32, i32
  }
  func.func @transform_1(%arg0: i32, %arg1: i32) -> (i32, i32) {
    %c0_i32 = arith.constant 0 : i32
    %c0_i32_0 = arith.constant 0 : i32
    return %arg0, %c0_i32 : i32, i32
  }
  func.func @transform_2(%arg0: i32, %arg1: i32) -> (i32, i32) {
    %c0_i32 = arith.constant 0 : i32
    return %arg0, %arg1 : i32, i32
  }
  func.func @transform_3(%arg0: i32, %arg1: i32) -> (i32, i32) {
    %c0_i32 = arith.constant 0 : i32
    return %arg0, %arg1 : i32, i32
  }
  func.func @transform_4(%arg0: i32, %arg1: i32) -> (i32, i32) {
    %c0_i32 = arith.constant 0 : i32
    return %arg0, %arg1 : i32, i32
  }
  func.func @transform_5(%arg0: i32, %arg1: i32) -> (i32, i32) {
    %c0_i32 = arith.constant 0 : i32
    return %arg0, %arg1 : i32, i32
  }
}

</mosaic_0001>

<llo_original>
// kernel: tpu_custom_call.1
$region0: #{tpu_custom_call.1}
  #allocation0 [shape = 'u32[]', space=smem, size = 0x4, offset = 0x4, fixed_abs, tag = 'smem constant byte address 0x4 - core index']
  #allocation1 [shape = 'u32[72,128]{1,0:T(1,128)}', space=vmem, size = 0x9000, scoped, tag = 'internal scratch']
  %s0 = inlined_call_operand.vmem [shape: f32[8,1], index: 0, kind: input, shape index: {}]
  %s1 = inlined_call_operand.vmem [shape: f32[8,1], index: 1, kind: input, shape index: {}]
  %s2 = inlined_call_operand.vmem [shape: f32[8,256], index: 2, kind: input, shape index: {}]
  %s3 = inlined_call_operand.hbm [shape: f32[8,256], index: 3, kind: input, shape index: {}]
  %s4 = inlined_call_operand.hbm [shape: f32[8,256], index: 4, kind: output, shape index: {0}]
  %s5 = inlined_call_operand.hbm [shape: f32[8,256], index: 5, kind: output, shape index: {1}]
  %6 = xla_tuple %s4, %s5
  %s7 = sld [smem:[#allocation0]]
  $region38: #{tpu_custom_call.1} parent=0
    _
  %s9 = ssub.s32 1, %s7
  %s10 = scalar_select 0, %s9, %s7
  $region1: #{tpu_custom_call.1} parent=0
    #allocation2 [shape = 'u8[8192]{0}', space=vmem, size = 0x2000, scoped, tag = 'input window, operand 3, single buffered']
    #allocation3 [shape = 's32[1]{0}', space=sflag, size = 0x4, scoped, tag = 'scoped memory for tpu_custom_call.1']
    #allocation4 [shape = 's32[1]{0}', space=sflag, size = 0x4, scoped, tag = 'scoped memory for tpu_custom_call.1']
    #allocation5 [shape = 'u8[8192]{0}', space=vmem, size = 0x2000, scoped, tag = 'output window, operand 0, single buffered']
    #allocation6 [shape = 'u8[8192]{0}', space=vmem, size = 0x2000, scoped, tag = 'output window, operand 1, single buffered']
    #allocation7 [shape = 's32[1]{0}', space=sflag, size = 0x4, scoped, tag = 'scoped memory for tpu_custom_call.1']
    %11 = vsyncpa [#allocation3], 0
    %12 = vsyncpa [#allocation4], 0
    %13 = vsyncpa [#allocation7], 0
    // Predicated region
    $region2: #{tpu_custom_call.1} parent=1 // pred_check
      _
    $region3: #{tpu_custom_call.1} parent=1 // pred_check_branch
      %15 = sbr.rel (0) target = $region5
    $region4: #{tpu_custom_call.1} parent=1 // pred_region
      _
    $region5: #{tpu_custom_call.1} parent=1 // pred_fallthru
      _
    // Predicated region
    $region6: #{tpu_custom_call.1} parent=1 // pred_check
      _
    $region7: #{tpu_custom_call.1} parent=1 // pred_check_branch
      %17 = sbr.rel (0) target = $region9
    $region8: #{tpu_custom_call.1} parent=1 // pred_region
      _
    $region9: #{tpu_custom_call.1} parent=1 // pred_fallthru
      _
    // Predicated region
    $region10: #{tpu_custom_call.1} parent=1 // pred_check
      _
    $region11: #{tpu_custom_call.1} parent=1 // pred_check_branch
      %19 = sbr.rel (0) target = $region13
    $region12: #{tpu_custom_call.1} parent=1 // pred_region
      _
    $region13: #{tpu_custom_call.1} parent=1 // pred_fallthru
      _
    // Predicated region
    $region14: #{tpu_custom_call.1} parent=1 // pred_check
      _
    $region15: #{tpu_custom_call.1} parent=1 // pred_check_branch
      %21 = sbr.rel (0) target = $region17
    $region16: #{tpu_custom_call.1} parent=1 // pred_region
      %23 = vsyncadd [#allocation3], 0
      %s25 = sshll.u32 %s3, 4
      %s26 = int_to_ptr.hbm [resolvable:$true] %s25
      %s27 = sshll.u32 [#allocation2], 4
      %s28 = int_to_ptr.vmem [resolvable:$true] %s27
      %30 = dma.hbm_to_vmem [thread:$0]  %s26, 256, %s28, [#allocation3]
    $region17: #{tpu_custom_call.1} parent=1 // pred_fallthru
      _
    // Predicated region
    $region18: #{tpu_custom_call.1} parent=1 // pred_check
      _
    $region19: #{tpu_custom_call.1} parent=1 // pred_check_branch
      %32 = sbr.rel (0) target = $region21
    $region20: #{tpu_custom_call.1} parent=1 // pred_region
      %34 = dma.done [#allocation3], 256
    $region21: #{tpu_custom_call.1} parent=1 // pred_fallthru
      _
    %v35 = vld [vmem:[%s0] sm:$0xff]
    %vm36 = vcmp.ne.f32.partialorder %v35, 0.0
    %v37 = vld [vmem:[%s1] sm:$0xff]
    %vm38 = vcmp.ne.f32.partialorder %v37, 0.0
    %v39 = vld [vmem:[%s2] sm:$0xff]
    %v40 = vld [vmem:[%s2 + $0x8] sm:$0xff]
    %v41 = vld [vmem:[#allocation2] sm:$0xff]
    %v42 = vld [vmem:[#allocation2 + $0x8] sm:$0xff]
    %v43 = vsel %vm36, 1, 0
    %44 = vset.pattern.permute.xlu0 0
    %45 = vperm.xlu0 %44, %v43
    %v46 = vpop.permute.xlu0 %45
    %vm47 = vcmp.eq.s32.totalorder %v46, 1
    %v48 = vsel %vm47, %v39, %v41
    %v49 = vsel %vm47, %v40, %v42
    %50 = vst [vmem:[#allocation5] sm:$0xff] %v48
    %51 = vst [vmem:[#allocation5 + $0x8] sm:$0xff] %v49
    %v52 = vsel %vm38, 1, 0
    %53 = vset.pattern.permute.xlu0 0
    %54 = vperm.xlu0 %53, %v52
    %v55 = vpop.permute.xlu0 %54
    %vm56 = vcmp.eq.s32.totalorder %v55, 1
    %v57 = vsel %vm56, %v41, %v39
    %v58 = vsel %vm56, %v42, %v40
    %59 = vst [vmem:[#allocation6] sm:$0xff] %v57
    %60 = vst [vmem:[#allocation6 + $0x8] sm:$0xff] %v58
    // Predicated region
    $region22: #{tpu_custom_call.1} parent=1 // pred_check
      _
    $region23: #{tpu_custom_call.1} parent=1 // pred_check_branch
      %62 = sbr.rel (0) target = $region25
    $region24: #{tpu_custom_call.1} parent=1 // pred_region
      %64 = vsyncadd [#allocation4], 0
      %s66 = sshll.u32 [#allocation5], 4
      %s67 = int_to_ptr.vmem [resolvable:$true] %s66
      %s68 = sshll.u32 %s4, 4
      %s69 = int_to_ptr.hbm [resolvable:$true] %s68
      %71 = dma.vmem_to_hbm [thread:$0]  %s67, 256, %s69, [#allocation4]
    $region25: #{tpu_custom_call.1} parent=1 // pred_fallthru
      _
    // Predicated region
    $region26: #{tpu_custom_call.1} parent=1 // pred_check
      _
    $region27: #{tpu_custom_call.1} parent=1 // pred_check_branch
      %73 = sbr.rel (0) target = $region29
    $region28: #{tpu_custom_call.1} parent=1 // pred_region
      %75 = vsyncadd [#allocation7], 0
      %s77 = sshll.u32 [#allocation6], 4
      %s78 = int_to_ptr.vmem [resolvable:$true] %s77
      %s79 = sshll.u32 %s5, 4
      %s80 = int_to_ptr.hbm [resolvable:$true] %s79
      %82 = dma.vmem_to_hbm [thread:$0]  %s78, 256, %s80, [#allocation7]
    $region29: #{tpu_custom_call.1} parent=1 // pred_fallthru
      _
    // Predicated region
    $region30: #{tpu_custom_call.1} parent=1 // pred_check
      _
    $region31: #{tpu_custom_call.1} parent=1 // pred_check_branch
      %84 = sbr.rel (0) target = $region33
    $region32: #{tpu_custom_call.1} parent=1 // pred_region
      %86 = dma.done [#allocation4], 256
    $region33: #{tpu_custom_call.1} parent=1 // pred_fallthru
      _
    // Predicated region
    $region34: #{tpu_custom_call.1} parent=1 // pred_check
      _
    $region35: #{tpu_custom_call.1} parent=1 // pred_check_branch
      %88 = sbr.rel (0) target = $region37
    $region36: #{tpu_custom_call.1} parent=1 // pred_region
      %90 = dma.done [#allocation7], 256
    $region37: #{tpu_custom_call.1} parent=1 // pred_fallthru
      _
    %91 = vsyncpa [#allocation3], 1
    %92 = vsyncpa [#allocation4], 1
    %93 = vsyncpa [#allocation7], 1

</llo_original>
